<compile_context>
chip_gen: v6e
topology: v6e:2x2x1
jax: 0.10.0
libtpu: 0.0.40
codegen_flags: <defaults>
</compile_context>

<pallas_src>
import functools

import jax
import jax.numpy as jnp
import numpy as np
from jax.experimental import pallas as pl
from jax.experimental.pallas import tpu as pltpu

HIDDEN = 120    # logical hidden width (matches the PyTorch module)
HPAD = 128      # lane-padded hidden width
TB_MAX = 2048   # max batch-tile rows; double-buffered tiles stay << 32 MiB VMEM


def _round_up(x, m):
    return ((x + m - 1) // m) * m


def _choose_batch_tiling(B):
    """Balanced batch tiles.

    Big enough to amortize the ~0.35 us per-grid-step overhead, >= 2 grid
    steps when there is enough real work (so v7x megacore can shard the
    parallel batch axis), and sized so the last tile is not mostly padding.
    """
    n_tiles = pl.cdiv(B, TB_MAX)
    if B >= 16:                       # at least two sublane groups of real work
        n_tiles = max(n_tiles, 2)
    TB = _round_up(pl.cdiv(B, n_tiles), 8)
    B_pad = _round_up(B, TB)
    return TB, B_pad


def _actor_kernel(log_min_std, log_max_std, out_dim,
                  ob_ref, w1_ref, b1_ref, w2_ref, b2_ref, wh_ref, bh_ref,
                  out_ref):
    """One batch tile: head MLP (bf16 MXU, f32 accum) + fused mean/std head."""
    x = ob_ref[...].astype(jnp.bfloat16)

    # head_layer: Linear -> ReLU -> Linear -> ReLU (hidden zero-padded 120->128,
    # so the math is unchanged).  bf16 operands, f32 accumulation.
    h = jnp.dot(x, w1_ref[...], preferred_element_type=jnp.float32) + b1_ref[...]
    h = jnp.maximum(h, 0.0).astype(jnp.bfloat16)
    h = jnp.dot(h, w2_ref[...], preferred_element_type=jnp.float32) + b2_ref[...]
    h = jnp.maximum(h, 0.0).astype(jnp.bfloat16)

    # Fused head matmul: cols [0, out_dim) = mean pre-act,
    # cols [out_dim, 2*out_dim) = log-std pre-act.
    raw = jnp.dot(h, wh_ref[...], preferred_element_type=jnp.float32) + bh_ref[...]

    mean_b = jnp.tanh(jnp.clip(raw, -3.0, 3.0))                  # mean path
    std_b = jnp.exp(jnp.clip(raw, log_min_std, log_max_std))     # std path
    col = jax.lax.broadcasted_iota(jnp.int32, raw.shape, dimension=1)
    out_ref[...] = jnp.where(col < out_dim, mean_b, std_b)


def actor_pallas_core(ob, packed, *, max_std, min_std):
    """Runs the Pallas kernel on a (B, state_dim) batch.

    Returns (mean_flat, std_flat) each of shape (B, out_dim), f32.
    """
    B, state_dim = ob.shape
    out_dim = int(packed["out_dim"])
    out_w = packed["wh"].shape[1]          # = 2 * out_dim (no lane padding)

    TB, B_pad = _choose_batch_tiling(B)
    if B_pad != B:
        ob = jnp.pad(ob, ((0, B_pad - B), (0, 0)))
    grid = (B_pad // TB,)

    kernel = functools.partial(
        _actor_kernel, float(np.log(min_std)), float(np.log(max_std)), out_dim)

    def weight_spec(shape):
        # Constant block index -> stays VMEM-resident across grid steps.
        return pl.BlockSpec(shape, lambda i: (0, 0))

    flops = 2 * B_pad * (state_dim * HPAD + HPAD * HPAD + HPAD * out_w)
    bytes_accessed = (4 * B_pad * (state_dim + out_w)                       # ob + out
                      + 2 * (state_dim * HPAD + HPAD * HPAD + HPAD * out_w)  # bf16 weights
                      + 4 * (2 * HPAD + out_w))                              # f32 biases
    cost = pl.CostEstimate(flops=flops,
                           transcendentals=2 * B_pad * out_w,
                           bytes_accessed=bytes_accessed)

    # TODO(synk): for a B~1 rollout loop, a P10 cross-call weight prefetch
    # (semaphore + VMEM-ref outputs from a prior pallas_call) would hide the
    # ~70 KiB weight DMA; omitted here to keep the kernel single-call.
    out = pl.pallas_call(
        kernel,
        out_shape=jax.ShapeDtypeStruct((B_pad, out_w), jnp.float32),
        grid=grid,
        in_specs=[
            pl.BlockSpec((TB, state_dim), lambda i: (i, 0)),   # ob tile (pipelined)
            weight_spec((state_dim, HPAD)),                    # w1 (bf16)
            weight_spec((1, HPAD)),                            # b1 (f32)
            weight_spec((HPAD, HPAD)),                         # w2 (bf16)
            weight_spec((1, HPAD)),                            # b2 (f32)
            weight_spec((HPAD, out_w)),                        # fused head weight (bf16)
            weight_spec((1, out_w)),                           # fused head bias (f32)
        ],
        out_specs=pl.BlockSpec((TB, out_w), lambda i: (i, 0)),
        compiler_params=pltpu.CompilerParams(
            dimension_semantics=("parallel",),   # megacore sharding on v7x
            vmem_limit_bytes=32 * 1024 * 1024),
        cost_estimate=cost,
    )(ob, packed["w1"], packed["b1"], packed["w2"], packed["b2"],
      packed["wh"], packed["bh"])

    mean_flat = out[:B, :out_dim]
    std_flat = out[:B, out_dim:]
    return mean_flat, std_flat


def actor_forward(ob, packed, *, action_dim, num_agents, max_std, min_std):
    """Mirrors Actor.forward semantics.

    PyTorch duplicates a B==1 batch and slices row 0 back out; rows are
    independent, so running the single row directly gives the identical result
    and skips the concat + 2x kernel work on the latency-critical path.
    """
    B = ob.shape[0]
    out_dim = action_dim * num_agents
    mean_flat, std_flat = actor_pallas_core(ob, packed,
                                            max_std=max_std, min_std=min_std)
    mean = mean_flat.reshape(B, -1, action_dim)           # (B, num_agents, action_dim)
    # unsqueeze(2).expand_as(mean): legal only when action_dim == 1, as in PyTorch.
    std = jnp.broadcast_to(std_flat.reshape(B, out_dim, 1), mean.shape)
    return mean, std


def init_actor_params(key, state_dim, action_dim, num_agents):
    """Deterministic init matching shapes of the PyTorch module (unpadded, f32).

    Weights: kaiming_uniform_(fan_in, relu) -> U(-sqrt(6/fan_in), sqrt(6/fan_in)).
    Biases:  PyTorch Linear default U(-1/sqrt(fan_in), 1/sqrt(fan_in)).
    Stored transposed as (in, out) for x @ W.
    """
    out_dim = action_dim * num_agents

    def linear(key, fan_in, fan_out):
        kw, kb = jax.random.split(key)
        w_bound = float(np.sqrt(6.0 / fan_in))
        b_bound = float(1.0 / np.sqrt(fan_in))
        w = jax.random.uniform(kw, (fan_in, fan_out), jnp.float32, -w_bound, w_bound)
        b = jax.random.uniform(kb, (1, fan_out), jnp.float32, -b_bound, b_bound)
        return w, b

    k1, k2, k3, k4 = jax.random.split(key, 4)
    w1, b1 = linear(k1, state_dim, HIDDEN)
    w2, b2 = linear(k2, HIDDEN, HIDDEN)
    wm, bm = linear(k3, HIDDEN, out_dim)
    ws, bs = linear(k4, HIDDEN, out_dim)
    return dict(w1=w1, b1=b1, w2=w2, b2=b2, wm=wm, bm=bm, ws=ws, bs=bs)


def pack_actor_params(params):
    """Pad hidden 120->128 (zeros), fuse the mean/std heads, cast weights bf16."""
    state_dim = params["w1"].shape[0]
    out_dim = params["wm"].shape[1]
    out_w = 2 * out_dim

    w1 = (jnp.zeros((state_dim, HPAD), jnp.float32)
          .at[:, :HIDDEN].set(params["w1"])).astype(jnp.bfloat16)
    b1 = jnp.zeros((1, HPAD), jnp.float32).at[:, :HIDDEN].set(params["b1"])
    w2 = (jnp.zeros((HPAD, HPAD), jnp.float32)
          .at[:HIDDEN, :HIDDEN].set(params["w2"])).astype(jnp.bfloat16)
    b2 = jnp.zeros((1, HPAD), jnp.float32).at[:, :HIDDEN].set(params["b2"])

    wh = (jnp.zeros((HPAD, out_w), jnp.float32)
          .at[:HIDDEN, :out_dim].set(params["wm"])
          .at[:HIDDEN, out_dim:].set(params["ws"])).astype(jnp.bfloat16)
    bh = (jnp.zeros((1, out_w), jnp.float32)
          .at[:, :out_dim].set(params["bm"])
          .at[:, out_dim:].set(params["bs"]))
    return dict(w1=w1, b1=b1, w2=w2, b2=b2, wh=wh, bh=bh, out_dim=out_dim)


def _reference_forward(ob, params, *, action_dim, num_agents, max_std, min_std):
    """Pure-JAX f32 reference mirroring the PyTorch module exactly (with the
    B==1 duplication) for correctness checking."""
    single_input = ob.shape[0] == 1
    if single_input:
        ob = jnp.concatenate([ob, ob], axis=0)
    h = jax.nn.relu(ob @ params["w1"] + params["b1"])
    h = jax.nn.relu(h @ params["w2"] + params["b2"])
    m = jnp.clip(h @ params["wm"] + params["bm"], -3.0, 3.0)
    mean = jnp.tanh(m.reshape(m.shape[0], -1, action_dim))
    s = jnp.clip(h @ params["ws"] + params["bs"], np.log(min_std), np.log(max_std))
    std = jnp.broadcast_to(jnp.exp(s)[:, :, None], mean.shape)
    if single_input:
        mean, std = mean[0:1], std[0:1]
    return mean, std


if __name__ == "__main__":
    # small shapes implied by the module: a flat state vector per sample
    batch = 2
    state_dim = 16
    action_dim = 1      # expand_as in the original module requires action_dim == 1
    num_agents = 4
    max_std, min_std = 2.0, 0.05

    # bf16 matmuls vs the f32 reference -> loosened tolerance (review guidance).
    RTOL, ATOL = 3e-2, 3e-2

    key = jax.random.PRNGKey(0)
    kp, kx = jax.random.split(key)
    params = init_actor_params(kp, state_dim, action_dim, num_agents)
    packed = pack_actor_params(params)
    ob = jax.random.normal(kx, (batch, state_dim), jnp.float32)

    mean, std = actor_forward(ob, packed, action_dim=action_dim,
                              num_agents=num_agents, max_std=max_std, min_std=min_std)
    mean = jax.block_until_ready(mean)
    std = jax.block_until_ready(std)

    mean_ref, std_ref = _reference_forward(ob, params, action_dim=action_dim,
                                           num_agents=num_agents,
                                           max_std=max_std, min_std=min_std)
    np.testing.assert_allclose(np.asarray(mean), np.asarray(mean_ref), rtol=RTOL, atol=ATOL)
    np.testing.assert_allclose(np.asarray(std), np.asarray(std_ref), rtol=RTOL, atol=ATOL)
    assert mean.shape == (batch, num_agents, action_dim)
    assert std.shape == (batch, num_agents, action_dim)

    # also exercise the single-input (B==1) path
    mean1, std1 = actor_forward(ob[0:1], packed, action_dim=action_dim,
                                num_agents=num_agents, max_std=max_std, min_std=min_std)
    mean1 = jax.block_until_ready(mean1)
    std1 = jax.block_until_ready(std1)
    mean1_ref, std1_ref = _reference_forward(ob[0:1], params, action_dim=action_dim,
                                             num_agents=num_agents,
                                             max_std=max_std, min_std=min_std)
    np.testing.assert_allclose(np.asarray(mean1), np.asarray(mean1_ref), rtol=RTOL, atol=ATOL)
    np.testing.assert_allclose(np.asarray(std1), np.asarray(std1_ref), rtol=RTOL, atol=ATOL)
    assert mean1.shape == (1, num_agents, action_dim)

    # exercise the multi-tile grid path (B > one tile -> >=2 balanced batch tiles)
    big_B = 520
    ob_big = jax.random.normal(jax.random.PRNGKey(1), (big_B, state_dim), jnp.float32)
    mean_b, std_b = actor_forward(ob_big, packed, action_dim=action_dim,
                                  num_agents=num_agents, max_std=max_std, min_std=min_std)
    mean_b = jax.block_until_ready(mean_b)
    std_b = jax.block_until_ready(std_b)
    mean_b_ref, std_b_ref = _reference_forward(ob_big, params, action_dim=action_dim,
                                               num_agents=num_agents,
                                               max_std=max_std, min_std=min_std)
    np.testing.assert_allclose(np.asarray(mean_b), np.asarray(mean_b_ref), rtol=RTOL, atol=ATOL)
    np.testing.assert_allclose(np.asarray(std_b), np.asarray(std_b_ref), rtol=RTOL, atol=ATOL)

    print("KERNEL_OK")
</pallas_src>

<mosaic_0001>
module attributes {stable_mosaic.version = 11 : i64} {
  func.func @_actor_kernel(%arg0: i32, %arg1: memref<8x16xf32, #tpu.memory_space<vmem>>, %arg2: memref<16x128xbf16, #tpu.memory_space<vmem>>, %arg3: memref<1x128xf32, #tpu.memory_space<vmem>>, %arg4: memref<128x128xbf16, #tpu.memory_space<vmem>>, %arg5: memref<1x128xf32, #tpu.memory_space<vmem>>, %arg6: memref<128x8xbf16, #tpu.memory_space<vmem>>, %arg7: memref<1x8xf32, #tpu.memory_space<vmem>>, %arg8: memref<8x8xf32, #tpu.memory_space<vmem>>) attributes {dimension_semantics = [#tpu.dimension_semantics<parallel>], iteration_bounds = array<i64: 1>, scalar_prefetch = 0 : i64, scratch_operands = 0 : i64, tpu.core_type = #tpu.core_type<tc>, window_params = [{transform_indices = @transform_0, window_bounds = array<i64: 8, 16>}, {pipeline_mode = #tpu.pipeline_mode<synchronous>, transform_indices = @transform_1, window_bounds = array<i64: 16, 128>}, {pipeline_mode = #tpu.pipeline_mode<synchronous>, transform_indices = @transform_2, window_bounds = array<i64: 1, 128>}, {pipeline_mode = #tpu.pipeline_mode<synchronous>, transform_indices = @transform_3, window_bounds = array<i64: 128, 128>}, {pipeline_mode = #tpu.pipeline_mode<synchronous>, transform_indices = @transform_4, window_bounds = array<i64: 1, 128>}, {pipeline_mode = #tpu.pipeline_mode<synchronous>, transform_indices = @transform_5, window_bounds = array<i64: 128, 8>}, {pipeline_mode = #tpu.pipeline_mode<synchronous>, transform_indices = @transform_6, window_bounds = array<i64: 1, 8>}, {transform_indices = @transform_7, window_bounds = array<i64: 8, 8>}]} {
    %c0 = arith.constant 0 : index
    %c0_0 = arith.constant 0 : index
    %0 = vector.load %arg1[%c0, %c0_0] : memref<8x16xf32, #tpu.memory_space<vmem>>, vector<8x16xf32>
    %1 = arith.truncf %0 : vector<8x16xf32> to vector<8x16xbf16>
    %c0_1 = arith.constant 0 : index
    %c0_2 = arith.constant 0 : index
    %2 = vector.load %arg2[%c0_1, %c0_2] : memref<16x128xbf16, #tpu.memory_space<vmem>>, vector<16x128xbf16>
    %cst = arith.constant dense<0.000000e+00> : vector<8x128xf32>
    %3 = tpu.matmul %1, %2, %cst {dimension_numbers = #tpu.dot_dimension_numbers<[1], [0], [0], [1], [0, 0, 1, 1], [], []>} : vector<8x16xbf16>, vector<16x128xbf16>, vector<8x128xf32> -> vector<8x128xf32>
    %c0_3 = arith.constant 0 : index
    %c0_4 = arith.constant 0 : index
    %4 = vector.load %arg3[%c0_3, %c0_4] : memref<1x128xf32, #tpu.memory_space<vmem>>, vector<1x128xf32>
    %5 = vector.broadcast %4 : vector<1x128xf32> to vector<8x128xf32>
    %6 = arith.addf %3, %5 : vector<8x128xf32>
    %cst_5 = arith.constant 0.000000e+00 : f32
    %7 = vector.broadcast %cst_5 : f32 to vector<8x128xf32>
    %8 = arith.maximumf %6, %7 : vector<8x128xf32>
    %9 = arith.truncf %8 : vector<8x128xf32> to vector<8x128xbf16>
    %c0_6 = arith.constant 0 : index
    %c0_7 = arith.constant 0 : index
    %10 = vector.load %arg4[%c0_6, %c0_7] : memref<128x128xbf16, #tpu.memory_space<vmem>>, vector<128x128xbf16>
    %cst_8 = arith.constant dense<0.000000e+00> : vector<8x128xf32>
    %11 = tpu.matmul %9, %10, %cst_8 {dimension_numbers = #tpu.dot_dimension_numbers<[1], [0], [0], [1], [0, 0, 1, 1], [], []>} : vector<8x128xbf16>, vector<128x128xbf16>, vector<8x128xf32> -> vector<8x128xf32>
    %c0_9 = arith.constant 0 : index
    %c0_10 = arith.constant 0 : index
    %12 = vector.load %arg5[%c0_9, %c0_10] : memref<1x128xf32, #tpu.memory_space<vmem>>, vector<1x128xf32>
    %13 = vector.broadcast %12 : vector<1x128xf32> to vector<8x128xf32>
    %14 = arith.addf %11, %13 : vector<8x128xf32>
    %cst_11 = arith.constant 0.000000e+00 : f32
    %15 = vector.broadcast %cst_11 : f32 to vector<8x128xf32>
    %16 = arith.maximumf %14, %15 : vector<8x128xf32>
    %17 = arith.truncf %16 : vector<8x128xf32> to vector<8x128xbf16>
    %c0_12 = arith.constant 0 : index
    %c0_13 = arith.constant 0 : index
    %18 = vector.load %arg6[%c0_12, %c0_13] : memref<128x8xbf16, #tpu.memory_space<vmem>>, vector<128x8xbf16>
    %cst_14 = arith.constant dense<0.000000e+00> : vector<8x8xf32>
    %19 = tpu.matmul %17, %18, %cst_14 {dimension_numbers = #tpu.dot_dimension_numbers<[1], [0], [0], [1], [0, 0, 1, 1], [], []>} : vector<8x128xbf16>, vector<128x8xbf16>, vector<8x8xf32> -> vector<8x8xf32>
    %c0_15 = arith.constant 0 : index
    %c0_16 = arith.constant 0 : index
    %20 = vector.load %arg7[%c0_15, %c0_16] : memref<1x8xf32, #tpu.memory_space<vmem>>, vector<1x8xf32>
    %21 = vector.broadcast %20 : vector<1x8xf32> to vector<8x8xf32>
    %22 = arith.addf %19, %21 : vector<8x8xf32>
    %cst_17 = arith.constant -3.000000e+00 : f32
    %cst_18 = arith.constant 3.000000e+00 : f32
    %23 = vector.broadcast %cst_17 : f32 to vector<8x8xf32>
    %24 = arith.maximumf %23, %22 : vector<8x8xf32>
    %25 = vector.broadcast %cst_18 : f32 to vector<8x8xf32>
    %26 = arith.minimumf %25, %24 : vector<8x8xf32>
    %27 = math.tanh %26 : vector<8x8xf32>
    %cst_19 = arith.constant -2.99573231 : f32
    %cst_20 = arith.constant 0.693147182 : f32
    %28 = vector.broadcast %cst_19 : f32 to vector<8x8xf32>
    %29 = arith.maximumf %28, %22 : vector<8x8xf32>
    %30 = vector.broadcast %cst_20 : f32 to vector<8x8xf32>
    %31 = arith.minimumf %30, %29 : vector<8x8xf32>
    %32 = math.exp %31 : vector<8x8xf32>
    %33 = tpu.iota {dimensions = array<i32: 1>} : vector<8x8xi32>
    %c4_i32 = arith.constant 4 : i32
    %34 = vector.broadcast %c4_i32 : i32 to vector<8x8xi32>
    %35 = arith.cmpi slt, %33, %34 : vector<8x8xi32>
    %36 = arith.select %35, %27, %32 : vector<8x8xi1>, vector<8x8xf32>
    %c0_21 = arith.constant 0 : index
    %c0_22 = arith.constant 0 : index
    %37 = vector.load %arg8[%c0_21, %c0_22] : memref<8x8xf32, #tpu.memory_space<vmem>>, vector<8x8xf32>
    tpu.vector_store %arg8[%c0_21, %c0_22], %36 {strides = array<i32>} : memref<8x8xf32, #tpu.memory_space<vmem>>, vector<8x8xf32>,
    return
  }
  func.func @transform_0(%arg0: i32) -> (i32, i32) {
    %c0_i32 = arith.constant 0 : i32
    %c0_i32_0 = arith.constant 0 : i32
    return %arg0, %c0_i32 : i32, i32
  }
  func.func @transform_1(%arg0: i32) -> (i32, i32) {
    %c0_i32 = arith.constant 0 : i32
    %c0_i32_0 = arith.constant 0 : i32
    %c0_i32_1 = arith.constant 0 : i32
    return %c0_i32, %c0_i32_0 : i32, i32
  }
  func.func @transform_2(%arg0: i32) -> (i32, i32) {
    %c0_i32 = arith.constant 0 : i32
    %c0_i32_0 = arith.constant 0 : i32
    %c0_i32_1 = arith.constant 0 : i32
    return %c0_i32, %c0_i32_0 : i32, i32
  }
  func.func @transform_3(%arg0: i32) -> (i32, i32) {
    %c0_i32 = arith.constant 0 : i32
    %c0_i32_0 = arith.constant 0 : i32
    %c0_i32_1 = arith.constant 0 : i32
    return %c0_i32, %c0_i32_0 : i32, i32
  }
  func.func @transform_4(%arg0: i32) -> (i32, i32) {
    %c0_i32 = arith.constant 0 : i32
    %c0_i32_0 = arith.constant 0 : i32
    %c0_i32_1 = arith.constant 0 : i32
    return %c0_i32, %c0_i32_0 : i32, i32
  }
  func.func @transform_5(%arg0: i32) -> (i32, i32) {
    %c0_i32 = arith.constant 0 : i32
    %c0_i32_0 = arith.constant 0 : i32
    %c0_i32_1 = arith.constant 0 : i32
    return %c0_i32, %c0_i32_0 : i32, i32
  }
  func.func @transform_6(%arg0: i32) -> (i32, i32) {
    %c0_i32 = arith.constant 0 : i32
    %c0_i32_0 = arith.constant 0 : i32
    %c0_i32_1 = arith.constant 0 : i32
    return %c0_i32, %c0_i32_0 : i32, i32
  }
  func.func @transform_7(%arg0: i32) -> (i32, i32) {
    %c0_i32 = arith.constant 0 : i32
    %c0_i32_0 = arith.constant 0 : i32
    return %arg0, %c0_i32 : i32, i32
  }
}

</mosaic_0001>

<llo_original>
// kernel: tpu_custom_call.1
$region0: #{tpu_custom_call.1}
  #allocation0 [shape = 'u32[]', space=smem, size = 0x4, offset = 0x4, fixed_abs, tag = 'smem constant byte address 0x4 - core index']
  #allocation1 [shape = 'u32[144,128]{1,0:T(1,128)}', space=vmem, size = 0x12000, scoped, tag = 'internal scratch']
  %s0 = inlined_call_operand.vmem [shape: f32[8,16], index: 0, kind: input, shape index: {}]
  %s1 = inlined_call_operand.hbm [shape: bf16[16,128], index: 1, kind: input, shape index: {}]
  %s2 = inlined_call_operand.vmem [shape: f32[1,128], index: 2, kind: input, shape index: {}]
  %s3 = inlined_call_operand.vmem [shape: bf16[128,128], index: 3, kind: input, shape index: {}]
  %s4 = inlined_call_operand.hbm [shape: f32[1,128], index: 4, kind: input, shape index: {}]
  %s5 = inlined_call_operand.vmem [shape: bf16[128,8], index: 5, kind: input, shape index: {}]
  %s6 = inlined_call_operand.vmem [shape: f32[1,8], index: 6, kind: input, shape index: {}]
  %s7 = inlined_call_operand.hbm [shape: f32[8,8], index: 7, kind: output, shape index: {}]
  %s8 = sld [smem:[#allocation0]]
  $region46: #{tpu_custom_call.1} parent=0
    _
  %s10 = ssub.s32 1, %s8
  %s11 = scalar_select 0, %s10, %s8
  $region1: #{tpu_custom_call.1} parent=0
    #allocation2 [shape = 'u8[4096]{0}', space=vmem, size = 0x1000, scoped, tag = 'input window, operand 1, single buffered']
    #allocation3 [shape = 's32[1]{0}', space=sflag, size = 0x4, scoped, tag = 'scoped memory for tpu_custom_call.1']
    #allocation4 [shape = 's32[1]{0}', space=sflag, size = 0x4, scoped, tag = 'scoped memory for tpu_custom_call.1']
    #allocation5 [shape = 'u8[512]{0}', space=vmem, size = 0x400, scoped, tag = 'input window, operand 4, single buffered']
    #allocation6 [shape = 's32[1]{0}', space=sflag, size = 0x4, scoped, tag = 'scoped memory for tpu_custom_call.1']
    #allocation7 [shape = 'u8[4096]{0}', space=vmem, size = 0x1000, scoped, tag = 'output window, operand 0, single buffered']
    %12 = vsyncpa [#allocation3], 0
    %13 = vsyncpa [#allocation6], 0
    %14 = vsyncpa [#allocation4], 0
    // Predicated region
    $region2: #{tpu_custom_call.1} parent=1 // pred_check
      _
    $region3: #{tpu_custom_call.1} parent=1 // pred_check_branch
      %16 = sbr.rel (0) target = $region5
    $region4: #{tpu_custom_call.1} parent=1 // pred_region
      _
    $region5: #{tpu_custom_call.1} parent=1 // pred_fallthru
      _
    // Predicated region
    $region6: #{tpu_custom_call.1} parent=1 // pred_check
      _
    $region7: #{tpu_custom_call.1} parent=1 // pred_check_branch
      %18 = sbr.rel (0) target = $region9
    $region8: #{tpu_custom_call.1} parent=1 // pred_region
      %s20 = ssub.s32 128, 128
      %21 = vsyncadd [#allocation3], %s20
      %s22 = sshll.u32 [#allocation2], 4
      %s23 = int_to_ptr.vmem [resolvable:$true] %s22
      %28 = dma.hbm_to_vmem [thread:$0]  %s1, 128, %s23, [#allocation3], 64, 64, 4
    $region9: #{tpu_custom_call.1} parent=1 // pred_fallthru
      _
    // Predicated region
    $region10: #{tpu_custom_call.1} parent=1 // pred_check
      _
    $region11: #{tpu_custom_call.1} parent=1 // pred_check_branch
      %30 = sbr.rel (0) target = $region13
    $region12: #{tpu_custom_call.1} parent=1 // pred_region
      _
    $region13: #{tpu_custom_call.1} parent=1 // pred_fallthru
      _
    // Predicated region
    $region14: #{tpu_custom_call.1} parent=1 // pred_check
      _
    $region15: #{tpu_custom_call.1} parent=1 // pred_check_branch
      %32 = sbr.rel (0) target = $region17
    $region16: #{tpu_custom_call.1} parent=1 // pred_region
      _
    $region17: #{tpu_custom_call.1} parent=1 // pred_fallthru
      _
    // Predicated region
    $region18: #{tpu_custom_call.1} parent=1 // pred_check
      _
    $region19: #{tpu_custom_call.1} parent=1 // pred_check_branch
      %34 = sbr.rel (0) target = $region21
    $region20: #{tpu_custom_call.1} parent=1 // pred_region
      %s36 = ssub.s32 16, 16
      %37 = vsyncadd [#allocation6], %s36
      %s39 = sshll.u32 [#allocation5], 4
      %s40 = int_to_ptr.vmem [resolvable:$true] %s39
      %42 = dma.hbm_to_vmem [thread:$0]  %s4, 16, %s40, [#allocation6]
    $region21: #{tpu_custom_call.1} parent=1 // pred_fallthru
      _
    // Predicated region
    $region22: #{tpu_custom_call.1} parent=1 // pred_check
      _
    $region23: #{tpu_custom_call.1} parent=1 // pred_check_branch
      %44 = sbr.rel (0) target = $region25
    $region24: #{tpu_custom_call.1} parent=1 // pred_region
      _
    $region25: #{tpu_custom_call.1} parent=1 // pred_fallthru
      _
    // Predicated region
    $region26: #{tpu_custom_call.1} parent=1 // pred_check
      _
    $region27: #{tpu_custom_call.1} parent=1 // pred_check_branch
      %46 = sbr.rel (0) target = $region29
    $region28: #{tpu_custom_call.1} parent=1 // pred_region
      _
    $region29: #{tpu_custom_call.1} parent=1 // pred_fallthru
      _
    // Predicated region
    $region30: #{tpu_custom_call.1} parent=1 // pred_check
      _
    $region31: #{tpu_custom_call.1} parent=1 // pred_check_branch
      %48 = sbr.rel (0) target = $region33
    $region32: #{tpu_custom_call.1} parent=1 // pred_region
      %49 = dma.done [#allocation3], 128
    $region33: #{tpu_custom_call.1} parent=1 // pred_fallthru
      _
    // Predicated region
    $region34: #{tpu_custom_call.1} parent=1 // pred_check
      _
    $region35: #{tpu_custom_call.1} parent=1 // pred_check_branch
      %51 = sbr.rel (0) target = $region37
    $region36: #{tpu_custom_call.1} parent=1 // pred_region
      %52 = dma.done [#allocation6], 16
    $region37: #{tpu_custom_call.1} parent=1 // pred_fallthru
      _
    %v54 = vld [vmem:[%s0] sm:$0xff]
    %v55 = vpack.c.bf16 %v54, %v54
    %v56 = vld [vmem:[#allocation2] sm:$0xf]
    %v57 = vld [vmem:[#allocation2 + $0x4] sm:$0xf]
    %v58 = vld [vmem:[%s2] sm:$0x1]
    %v60 = vlaneseq
    %v61 = vshrl.u32 %v60, 7
    %v62 = vsub.s32 0, %v61
    %v63 = vrot.slane %v58, %v62
    %v67 = vunpack.c.l.b16 %v56
    %v68 = vunpack.c.l.b16 %v57
    %v69 = vpack.c.b16 %v68, %v67
    %vm71 = vcmask 130048
    %v73 = vsel %vm71, %v55, 0
    %75 = vmatprep.subr.bf16.mxu0 0
    %76 = vmatpush1.bf16.msra.mxu0 0
    %77 = vmatprep.subr.bf16.mxu0 0
    %78 = vmatpush1.bf16.msra.mxu0 0
    %79 = vmatprep.subr.bf16.mxu0 0
    %80 = vmatpush1.bf16.msra.mxu0 0
    %81 = vmatprep.subr.bf16.mxu0 0
    %82 = vmatpush1.bf16.msra.mxu0 0
    %83 = vmatprep.subr.bf16.mxu0 0
    %84 = vmatpush1.bf16.msra.mxu0 0
    %85 = vmatprep.subr.bf16.mxu0 0
    %86 = vmatpush1.bf16.msra.mxu0 0
    %87 = vmatprep.subr.bf16.mxu0 0
    %88 = vmatpush1.bf16.msra.mxu0 0
    %89 = vmatprep.subr.bf16.mxu0 0
    %90 = vmatpush1.bf16.msra.mxu0 %v69
    %91 = vmatprep.subr.bf16.mxu0 0
    %92 = vmatpush2.bf16.msra.mxu0 0
    %93 = vmatprep.subr.bf16.mxu0 0
    %94 = vmatpush2.bf16.msra.mxu0 0
    %95 = vmatprep.subr.bf16.mxu0 0
    %96 = vmatpush2.bf16.msra.mxu0 0
    %97 = vmatprep.subr.bf16.mxu0 0
    %98 = vmatpush2.bf16.msra.mxu0 0
    %99 = vmatprep.subr.bf16.mxu0 0
    %100 = vmatpush2.bf16.msra.mxu0 0
    %101 = vmatprep.subr.bf16.mxu0 0
    %102 = vmatpush2.bf16.msra.mxu0 0
    %103 = vmatprep.subr.bf16.mxu0 0
    %104 = vmatpush2.bf16.msra.mxu0 0
    %105 = vmatprep.subr.bf16.mxu0 0
    %106 = vmatpush2.bf16.msra.mxu0 0
    %107 = vmatprep.mubr.bf16.mxu0 0
    %108 = vmatmul.mubr.bf16.gmra.mxu0 %v73
    %v109 = vpop.f32.mrf.mxu0
    %v110 = vadd.f32 %v63, %v109
    %v111 = vpop.f32.mrf.mxu0
    %v112 = vpop.f32.mrf.mxu0
    %v113 = vpop.f32.mrf.mxu0
    %114 = vdwg.mxu0
    %v115 = vmax.f32 %v110, 0.0
    %v116 = vpack.c.bf16 %v115, %v115
    %v117 = vld [vmem:[%s3] sm:$0xf]
    %v118 = vld [vmem:[%s3 + $0x4] sm:$0xf]
    %v119 = vld [vmem:[%s3 + $0x8] sm:$0xf]
    %v120 = vld [vmem:[%s3 + $0xc] sm:$0xf]
    %v121 = vld [vmem:[%s3 + $0x10] sm:$0xf]
    %v122 = vld [vmem:[%s3 + $0x14] sm:$0xf]
    %v123 = vld [vmem:[%s3 + $0x18] sm:$0xf]
    %v124 = vld [vmem:[%s3 + $0x1c] sm:$0xf]
    %v125 = vld [vmem:[%s3 + $0x20] sm:$0xf]
    %v126 = vld [vmem:[%s3 + $0x24] sm:$0xf]
    %v127 = vld [vmem:[%s3 + $0x28] sm:$0xf]
    %v128 = vld [vmem:[%s3 + $0x2c] sm:$0xf]
    %v129 = vld [vmem:[%s3 + $0x30] sm:$0xf]
    %v130 = vld [vmem:[%s3 + $0x34] sm:$0xf]
    %v131 = vld [vmem:[%s3 + $0x38] sm:$0xf]
    %v132 = vld [vmem:[%s3 + $0x3c] sm:$0xf]
    %v133 = vld [vmem:[#allocation5] sm:$0x1]
    %v135 = vlaneseq
    %v136 = vshrl.u32 %v135, 7
    %v137 = vsub.s32 0, %v136
    %v138 = vrot.slane %v133, %v137
    %v156 = vunpack.c.l.b16 %v117
    %v157 = vunpack.c.l.b16 %v118
    %v158 = vunpack.c.l.b16 %v119
    %v159 = vunpack.c.l.b16 %v120
    %v160 = vunpack.c.l.b16 %v121
    %v161 = vunpack.c.l.b16 %v122
    %v162 = vunpack.c.l.b16 %v123
    %v163 = vunpack.c.l.b16 %v124
    %v164 = vunpack.c.l.b16 %v125
    %v165 = vunpack.c.l.b16 %v126
    %v166 = vunpack.c.l.b16 %v127
    %v167 = vunpack.c.l.b16 %v128
    %v168 = vunpack.c.l.b16 %v129
    %v169 = vunpack.c.l.b16 %v130
    %v170 = vunpack.c.l.b16 %v131
    %v171 = vunpack.c.l.b16 %v132
    %v172 = vpack.c.b16 %v157, %v156
    %v173 = vpack.c.b16 %v159, %v158
    %v174 = vpack.c.b16 %v161, %v160
    %v175 = vpack.c.b16 %v163, %v162
    %v176 = vpack.c.b16 %v165, %v164
    %v177 = vpack.c.b16 %v167, %v166
    %v178 = vpack.c.b16 %v169, %v168
    %v179 = vpack.c.b16 %v171, %v170
    %188 = vmatprep.subr.bf16.mxu0 0
    %189 = vmatpush1.bf16.msra.mxu0 %v179
    %190 = vmatprep.subr.bf16.mxu0 0
    %191 = vmatpush1.bf16.msra.mxu0 %v178
    %192 = vmatprep.subr.bf16.mxu0 0
    %193 = vmatpush1.bf16.msra.mxu0 %v177
    %194 = vmatprep.subr.bf16.mxu0 0
    %195 = vmatpush1.bf16.msra.mxu0 %v176
    %196 = vmatprep.subr.bf16.mxu0 0
    %197 = vmatpush1.bf16.msra.mxu0 %v175
    %198 = vmatprep.subr.bf16.mxu0 0
    %199 = vmatpush1.bf16.msra.mxu0 %v174
    %200 = vmatprep.subr.bf16.mxu0 0
    %201 = vmatpush1.bf16.msra.mxu0 %v173
    %202 = vmatprep.subr.bf16.mxu0 0
    %203 = vmatpush1.bf16.msra.mxu0 %v172
    %204 = vmatprep.subr.bf16.mxu0 0
    %205 = vmatpush2.bf16.msra.mxu0 0
    %206 = vmatprep.subr.bf16.mxu0 0
    %207 = vmatpush2.bf16.msra.mxu0 0
    %208 = vmatprep.subr.bf16.mxu0 0
    %209 = vmatpush2.bf16.msra.mxu0 0
    %210 = vmatprep.subr.bf16.mxu0 0
    %211 = vmatpush2.bf16.msra.mxu0 0
    %212 = vmatprep.subr.bf16.mxu0 0
    %213 = vmatpush2.bf16.msra.mxu0 0
    %214 = vmatprep.subr.bf16.mxu0 0
    %215 = vmatpush2.bf16.msra.mxu0 0
    %216 = vmatprep.subr.bf16.mxu0 0
    %217 = vmatpush2.bf16.msra.mxu0 0
    %218 = vmatprep.subr.bf16.mxu0 0
    %219 = vmatpush2.bf16.msra.mxu0 0
    %220 = vmatprep.mubr.bf16.mxu0 0
    %221 = vmatmul.mubr.bf16.gmra.mxu0 %v116
    %v222 = vpop.f32.mrf.mxu0
    %v223 = vadd.f32 %v138, %v222
    %v224 = vpop.f32.mrf.mxu0
    %v225 = vpop.f32.mrf.mxu0
    %v226 = vpop.f32.mrf.mxu0
    %227 = vdwg.mxu0
    %v228 = vmax.f32 %v223, 0.0
    %v229 = vpack.c.bf16 %v228, %v228
    %v230 = vld [vmem:[%s5] sm:$0xf]
    %v231 = vld [vmem:[%s5 + $0x4] sm:$0xf]
    %v232 = vld [vmem:[%s5 + $0x8] sm:$0xf]
    %v233 = vld [vmem:[%s5 + $0xc] sm:$0xf]
    %v234 = vld [vmem:[%s5 + $0x10] sm:$0xf]
    %v235 = vld [vmem:[%s5 + $0x14] sm:$0xf]
    %v236 = vld [vmem:[%s5 + $0x18] sm:$0xf]
    %v237 = vld [vmem:[%s5 + $0x1c] sm:$0xf]
    %v238 = vld [vmem:[%s5 + $0x20] sm:$0xf]
    %v239 = vld [vmem:[%s5 + $0x24] sm:$0xf]
    %v240 = vld [vmem:[%s5 + $0x28] sm:$0xf]
    %v241 = vld [vmem:[%s5 + $0x2c] sm:$0xf]
    %v242 = vld [vmem:[%s5 + $0x30] sm:$0xf]
    %v243 = vld [vmem:[%s5 + $0x34] sm:$0xf]
    %v244 = vld [vmem:[%s5 + $0x38] sm:$0xf]
    %v245 = vld [vmem:[%s5 + $0x3c] sm:$0xf]
    %v246 = vld [vmem:[%s6] sm:$0x1]
    %v248 = vlaneseq
    %v249 = vshrl.u32 %v248, 7
    %v250 = vsub.s32 0, %v249
    %v251 = vrot.slane %v246, %v250
    %v269 = vunpack.c.l.b16 %v230
    %v270 = vunpack.c.l.b16 %v231
    %v271 = vunpack.c.l.b16 %v232
    %v272 = vunpack.c.l.b16 %v233
    %v273 = vunpack.c.l.b16 %v234
    %v274 = vunpack.c.l.b16 %v235
    %v275 = vunpack.c.l.b16 %v236
    %v276 = vunpack.c.l.b16 %v237
    %v277 = vunpack.c.l.b16 %v238
    %v278 = vunpack.c.l.b16 %v239
    %v279 = vunpack.c.l.b16 %v240
    %v280 = vunpack.c.l.b16 %v241
    %v281 = vunpack.c.l.b16 %v242
    %v282 = vunpack.c.l.b16 %v243
    %v283 = vunpack.c.l.b16 %v244
    %v284 = vunpack.c.l.b16 %v245
    %v285 = vpack.c.b16 %v270, %v269
    %v286 = vpack.c.b16 %v272, %v271
    %v287 = vpack.c.b16 %v274, %v273
    %v288 = vpack.c.b16 %v276, %v275
    %v289 = vpack.c.b16 %v278, %v277
    %v290 = vpack.c.b16 %v280, %v279
    %v291 = vpack.c.b16 %v282, %v281
    %v292 = vpack.c.b16 %v284, %v283
    %301 = vmatprep.subr.bf16.mxu0 0
    %302 = vmatpush1.bf16.msra.mxu0 %v292
    %303 = vmatprep.subr.bf16.mxu0 0
    %304 = vmatpush1.bf16.msra.mxu0 %v291
    %305 = vmatprep.subr.bf16.mxu0 0
    %306 = vmatpush1.bf16.msra.mxu0 %v290
    %307 = vmatprep.subr.bf16.mxu0 0
    %308 = vmatpush1.bf16.msra.mxu0 %v289
    %309 = vmatprep.subr.bf16.mxu0 0
    %310 = vmatpush1.bf16.msra.mxu0 %v288
    %311 = vmatprep.subr.bf16.mxu0 0
    %312 = vmatpush1.bf16.msra.mxu0 %v287
    %313 = vmatprep.subr.bf16.mxu0 0
    %314 = vmatpush1.bf16.msra.mxu0 %v286
    %315 = vmatprep.subr.bf16.mxu0 0
    %316 = vmatpush1.bf16.msra.mxu0 %v285
    %317 = vmatprep.subr.bf16.mxu0 0
    %318 = vmatpush2.bf16.msra.mxu0 0
    %319 = vmatprep.subr.bf16.mxu0 0
    %320 = vmatpush2.bf16.msra.mxu0 0
    %321 = vmatprep.subr.bf16.mxu0 0
    %322 = vmatpush2.bf16.msra.mxu0 0
    %323 = vmatprep.subr.bf16.mxu0 0
    %324 = vmatpush2.bf16.msra.mxu0 0
    %325 = vmatprep.subr.bf16.mxu0 0
    %326 = vmatpush2.bf16.msra.mxu0 0
    %327 = vmatprep.subr.bf16.mxu0 0
    %328 = vmatpush2.bf16.msra.mxu0 0
    %329 = vmatprep.subr.bf16.mxu0 0
    %330 = vmatpush2.bf16.msra.mxu0 0
    %331 = vmatprep.subr.bf16.mxu0 0
    %332 = vmatpush2.bf16.msra.mxu0 0
    %333 = vmatprep.mubr.bf16.mxu0 0
    %334 = vmatmul.mubr.bf16.gmra.mxu0 %v229
    %v335 = vpop.f32.mrf.mxu0
    %v336 = vadd.f32 %v251, %v335
    %v337 = vpop.f32.mrf.mxu0
    %v338 = vpop.f32.mrf.mxu0
    %v339 = vpop.f32.mrf.mxu0
    %340 = vdwg.mxu0
    %v341 = vmax.f32 %v336, -3.0
    %v342 = vmin.f32 %v341, 3.0
    %v343 = vtanh.pop %v342
    %v344 = vmax.f32 %v336, -2.9957323
    %v345 = vmin.f32 %v344, 0.6931472
    %v346 = vmul.f32 %v345, 1.442695
    %v347 = vpow.pop %v346
    %v348 = vlaneseq
    %v349 = vand.u32 %v348, 127
    %vm350 = vcmp.lt.s32.totalorder %v349, 4
    %v351 = vsel %vm350, %v343, %v347
    %vm352 = vcmask 64512
    %353 = vst.msk [vmem:[#allocation7] sm:$0xff] %vm352, %v351
    // Predicated region
    $region38: #{tpu_custom_call.1} parent=1 // pred_check
      _
    $region39: #{tpu_custom_call.1} parent=1 // pred_check_branch
      %355 = sbr.rel (0) target = $region41
    $region40: #{tpu_custom_call.1} parent=1 // pred_region
      %s357 = ssub.s32 128, 128
      %358 = vsyncadd [#allocation4], %s357
      %s360 = sshll.u32 [#allocation7], 4
      %s361 = int_to_ptr.vmem [resolvable:$true] %s360
      %363 = dma.vmem_to_hbm [thread:$0]  %s361, 128, %s7, [#allocation4]
    $region41: #{tpu_custom_call.1} parent=1 // pred_fallthru
      _
    // Predicated region
    $region42: #{tpu_custom_call.1} parent=1 // pred_check
      _
    $region43: #{tpu_custom_call.1} parent=1 // pred_check_branch
      %365 = sbr.rel (0) target = $region45
    $region44: #{tpu_custom_call.1} parent=1 // pred_region
      %366 = dma.done [#allocation4], 128
    $region45: #{tpu_custom_call.1} parent=1 // pred_fallthru
      _
    %367 = vsyncpa [#allocation3], 1
    %368 = vsyncpa [#allocation6], 1
    %369 = vsyncpa [#allocation4], 1

</llo_original>
